<compile_context>
chip_gen: v7x
topology: tpu7x:2x2x1
jax: 0.10.0
libtpu: 0.0.40
codegen_flags: <defaults>
</compile_context>

<pallas_src>
import jax
import jax.numpy as jnp
from jax.experimental import pallas as pl
from jax.experimental.pallas import tpu as pltpu

_LANE = 128
_ROW_ALIGN = 32        # multiple of sublane packing for f32(8)/bf16(16)/int8(32)
_MAX_ROW_TILE = 4096   # (4096, 128) f32 block = 2 MiB per buffer


def _round_up(x, m):
    return ((x + m - 1) // m) * m


def _choose_row_tile(rows):
    """Pick a row tile that is a multiple of 32 (or the full extent for tiny
    tensors), caps the block at 2 MiB (f32), and yields >= 2 evenly sized
    blocks whenever possible so v7x's two TensorCores both get work."""
    if rows < 2 * _ROW_ALIGN:
        return rows  # tiny tensor: single full-extent block (always legal)
    n_blocks = max(2, -(-rows // _MAX_ROW_TILE))
    return min(_MAX_ROW_TILE, _round_up(-(-rows // n_blocks), _ROW_ALIGN))


def _mish_kernel(x_ref, o_ref):
    x = x_ref[...].astype(jnp.float32)
    # tanh(softplus(x)) = tanh(log(1 + e^x)) = 1 - 2 / ((1 + e^x)^2 + 1)
    # Exact divide keeps the overflow limit (2/inf = 0 -> y = x) and the
    # 1e-5 abs tolerance for large-|x| inputs.
    t = jnp.exp(x)
    u = 1.0 + t
    y = x * (1.0 - 2.0 / (u * u + 1.0))
    o_ref[...] = y.astype(o_ref.dtype)


def mish(x):
    """Elementwise Mish via Pallas. Accepts any shape / float dtype."""
    orig_shape = x.shape
    orig_dtype = x.dtype
    n = x.size

    if n % _LANE == 0:
        # Metadata-only reshape to a lane-dense slab (no HBM copy).
        slab = x.reshape(-1, _LANE)
        padded = False
    else:
        # Rare ragged tail (n not a multiple of 128): pad + slice fallback.
        # TODO(synk): handle the ragged tail with a masked final block instead
        # of the extra pad/slice HBM passes.
        flat = x.reshape(-1)
        n_pad = _round_up(n, _LANE)
        flat = jnp.pad(flat, (0, n_pad - n))
        slab = flat.reshape(-1, _LANE)
        padded = True

    rows = slab.shape[0]
    row_tile = _choose_row_tile(rows)
    grid = (pl.cdiv(rows, row_tile),)
    itemsize = jnp.dtype(orig_dtype).itemsize

    out = pl.pallas_call(
        _mish_kernel,
        out_shape=jax.ShapeDtypeStruct(slab.shape, orig_dtype),
        grid_spec=pltpu.PrefetchScalarGridSpec(
            num_scalar_prefetch=0,
            grid=grid,
            in_specs=[pl.BlockSpec((row_tile, _LANE), lambda i: (i, 0))],
            out_specs=pl.BlockSpec((row_tile, _LANE), lambda i: (i, 0)),
        ),
        compiler_params=pltpu.CompilerParams(
            dimension_semantics=("parallel",),  # shard row loop across v7x TCs
        ),
        cost_estimate=pl.CostEstimate(
            flops=7 * n,
            transcendentals=n,
            bytes_accessed=2 * n * itemsize,
        ),
    )(slab)

    if padded:
        return out.reshape(-1)[:n].reshape(orig_shape)
    return out.reshape(orig_shape)


if __name__ == "__main__":
    key = jax.random.PRNGKey(0)

    # NCHW, small shapes consistent with a conv-net activation.
    x = jax.random.normal(key, (2, 4, 16, 16), dtype=jnp.float32) * 3.0
    y = jax.block_until_ready(mish(x))
    ref = x * jnp.tanh(jax.nn.softplus(x))
    assert y.shape == x.shape and y.dtype == x.dtype
    assert jnp.max(jnp.abs(y - ref)) < 1e-5

    # Medium tensor: exercises the multi-block grid path (rows=256 -> 2 blocks).
    k2 = jax.random.PRNGKey(1)
    x2 = jax.random.normal(k2, (4, 8, 32, 32), dtype=jnp.float32) * 3.0
    y2 = jax.block_until_ready(mish(x2))
    ref2 = x2 * jnp.tanh(jax.nn.softplus(x2))
    assert jnp.max(jnp.abs(y2 - ref2)) < 1e-5

    # bf16 path (dtype-aware tiling; math in f32, I/O in bf16).
    xb = (jax.random.normal(jax.random.PRNGKey(2), (2, 4, 16, 16)) * 3.0
          ).astype(jnp.bfloat16)
    yb = jax.block_until_ready(mish(xb))
    refb = (xb.astype(jnp.float32)
            * jnp.tanh(jax.nn.softplus(xb.astype(jnp.float32))))
    assert yb.shape == xb.shape and yb.dtype == xb.dtype
    assert jnp.max(jnp.abs(yb.astype(jnp.float32) - refb)) < 5e-2

    # Extreme values (exp overflow/underflow) + unaligned (padded) path.
    xe = jnp.array([-100.0, -20.0, -1.0, 0.0, 1.0, 20.0, 88.0, 100.0],
                   dtype=jnp.float32)
    ye = jax.block_until_ready(mish(xe))
    refe = xe * jnp.tanh(jax.nn.softplus(xe))
    assert ye.shape == xe.shape and ye.dtype == xe.dtype
    assert jnp.max(jnp.abs(ye - refe)) < 1e-5

    print("KERNEL_OK")
</pallas_src>

<mosaic_0001>
module attributes {stable_mosaic.version = 11 : i64} {
  func.func @_mish_kernel(%arg0: i32, %arg1: memref<16x128xf32, #tpu.memory_space<vmem>>, %arg2: memref<16x128xf32, #tpu.memory_space<vmem>>) attributes {dimension_semantics = [#tpu.dimension_semantics<parallel>], iteration_bounds = array<i64: 1>, scalar_prefetch = 0 : i64, scratch_operands = 0 : i64, tpu.core_type = #tpu.core_type<tc>, window_params = [{transform_indices = @transform_0, window_bounds = array<i64: 16, 128>}, {transform_indices = @transform_1, window_bounds = array<i64: 16, 128>}]} {
    %c0 = arith.constant 0 : index
    %c0_0 = arith.constant 0 : index
    %0 = vector.load %arg1[%c0, %c0_0] : memref<16x128xf32, #tpu.memory_space<vmem>>, vector<16x128xf32>
    %1 = math.exp %0 : vector<16x128xf32>
    %cst = arith.constant 1.000000e+00 : f32
    %2 = vector.broadcast %cst : f32 to vector<16x128xf32>
    %3 = arith.addf %2, %1 : vector<16x128xf32>
    %4 = arith.mulf %3, %3 : vector<16x128xf32>
    %cst_1 = arith.constant 1.000000e+00 : f32
    %5 = vector.broadcast %cst_1 : f32 to vector<16x128xf32>
    %6 = arith.addf %4, %5 : vector<16x128xf32>
    %cst_2 = arith.constant 2.000000e+00 : f32
    %7 = vector.broadcast %cst_2 : f32 to vector<16x128xf32>
    %8 = arith.divf %7, %6 : vector<16x128xf32>
    %cst_3 = arith.constant 1.000000e+00 : f32
    %9 = vector.broadcast %cst_3 : f32 to vector<16x128xf32>
    %10 = arith.subf %9, %8 : vector<16x128xf32>
    %11 = arith.mulf %0, %10 : vector<16x128xf32>
    %c0_4 = arith.constant 0 : index
    %c0_5 = arith.constant 0 : index
    %12 = vector.load %arg2[%c0_4, %c0_5] : memref<16x128xf32, #tpu.memory_space<vmem>>, vector<16x128xf32>
    tpu.vector_store %arg2[%c0_4, %c0_5], %11 {strides = array<i32>} : memref<16x128xf32, #tpu.memory_space<vmem>>, vector<16x128xf32>,
    return
  }
  func.func @transform_0(%arg0: i32) -> (i32, i32) {
    %c0_i32 = arith.constant 0 : i32
    %c0_i32_0 = arith.constant 0 : i32
    return %arg0, %c0_i32 : i32, i32
  }
  func.func @transform_1(%arg0: i32) -> (i32, i32) {
    %c0_i32 = arith.constant 0 : i32
    %c0_i32_0 = arith.constant 0 : i32
    return %arg0, %c0_i32 : i32, i32
  }
}

</mosaic_0001>

<llo_original>
// kernel: tpu_custom_call.1
$region0: #{tpu_custom_call.1}
  #allocation0 [shape = 'u32[]', space=smem, size = 0x4, offset = 0x4, fixed_abs, tag = 'smem constant byte address 0x4 - core index']
  #allocation1 [shape = 'u32[144,128]{1,0:T(1,128)}', space=vmem, size = 0x12000, scoped, tag = 'internal scratch']
  %s0 = inlined_call_operand.hbm [shape: f32[16,128], index: 0, kind: input, shape index: {}]
  %s1 = inlined_call_operand.hbm [shape: f32[16,128], index: 1, kind: output, shape index: {}]
  %s2 = sld [smem:[#allocation0]]
  $region18: #{tpu_custom_call.1} parent=0
    _
  %s4 = ssub.s32 1, %s2
  %s5 = scalar_select 0, %s4, %s2
  $region1: #{tpu_custom_call.1} parent=0
    #allocation2 [shape = 'u8[8192]{0}', space=vmem, size = 0x2000, scoped, tag = 'input window, operand 0, single buffered']
    #allocation3 [shape = 's32[1]{0}', space=sflag, size = 0x4, scoped, tag = 'scoped memory for tpu_custom_call.1']
    #allocation4 [shape = 's32[1]{0}', space=sflag, size = 0x4, scoped, tag = 'scoped memory for tpu_custom_call.1']
    #allocation5 [shape = 'u8[8192]{0}', space=vmem, size = 0x2000, scoped, tag = 'output window, operand 0, single buffered']
    %6 = vsyncpa [#allocation3], 0
    %7 = vsyncpa [#allocation4], 0
    // Predicated region
    $region2: #{tpu_custom_call.1} parent=1 // pred_check
      _
    $region3: #{tpu_custom_call.1} parent=1 // pred_check_branch
      %9 = sbr.rel (0) target = $region5
    $region4: #{tpu_custom_call.1} parent=1 // pred_region
      %s11 = ssub.s32 256, 256
      %12 = vsyncadd [#allocation3], %s11
      %s13 = sshll.u32 [#allocation2], 4
      %s14 = int_to_ptr.vmem [resolvable:$true] %s13
      %19 = dma.hbm_to_vmem [thread:$0]  %s0, 256, %s14, [#allocation3], 128, 128, 8
    $region5: #{tpu_custom_call.1} parent=1 // pred_fallthru
      _
    // Predicated region
    $region6: #{tpu_custom_call.1} parent=1 // pred_check
      _
    $region7: #{tpu_custom_call.1} parent=1 // pred_check_branch
      %21 = sbr.rel (0) target = $region9
    $region8: #{tpu_custom_call.1} parent=1 // pred_region
      %22 = dma.done [#allocation3], 256
    $region9: #{tpu_custom_call.1} parent=1 // pred_fallthru
      _
    %v23 = vld [vmem:[#allocation2] sm:$0xff]
    %v24 = vld [vmem:[#allocation2 + $0x8] sm:$0xff]
    %v25 = vmul.f32 %v23, 1.442695
    %v26 = vpow.pop %v25
    %v27 = vmul.f32 %v24, 1.442695
    %v28 = vpow.pop %v27
    %v29 = vadd.f32 %v26, 1.0
    %v30 = vadd.f32 %v28, 1.0
    %v31 = vmul.f32 %v29, %v29
    %v32 = vmul.f32 %v30, %v30
    %v33 = vadd.f32 %v31, 1.0
    %v34 = vadd.f32 %v32, 1.0
    %v35 = vrcp.pop %v33
    %v36 = vmul.f32 2.0, %v35
    %v37 = vrcp.pop %v34
    %v38 = vmul.f32 2.0, %v37
    %v39 = vsub.f32 1.0, %v36
    %v40 = vsub.f32 1.0, %v38
    %v41 = vmul.f32 %v23, %v39
    %v42 = vmul.f32 %v24, %v40
    %43 = vst [vmem:[#allocation5] sm:$0xff] %v41
    %44 = vst [vmem:[#allocation5 + $0x8] sm:$0xff] %v42
    // Predicated region
    $region10: #{tpu_custom_call.1} parent=1 // pred_check
      _
    $region11: #{tpu_custom_call.1} parent=1 // pred_check_branch
      %46 = sbr.rel (0) target = $region13
    $region12: #{tpu_custom_call.1} parent=1 // pred_region
      %s48 = ssub.s32 256, 256
      %49 = vsyncadd [#allocation4], %s48
      %s50 = sshll.u32 [#allocation5], 4
      %s51 = int_to_ptr.vmem [resolvable:$true] %s50
      %56 = dma.vmem_to_hbm [thread:$0]  %s51, 256, %s1, [#allocation4], 128, 128, 8
    $region13: #{tpu_custom_call.1} parent=1 // pred_fallthru
      _
    // Predicated region
    $region14: #{tpu_custom_call.1} parent=1 // pred_check
      _
    $region15: #{tpu_custom_call.1} parent=1 // pred_check_branch
      %58 = sbr.rel (0) target = $region17
    $region16: #{tpu_custom_call.1} parent=1 // pred_region
      %59 = dma.done [#allocation4], 256
    $region17: #{tpu_custom_call.1} parent=1 // pred_fallthru
      _
    %60 = vsyncpa [#allocation3], 1
    %61 = vsyncpa [#allocation4], 1

</llo_original>
